<compile_context>
chip_gen: v7x
topology: tpu7x:2x2x1
jax: 0.10.0
libtpu: 0.0.40
codegen_flags: <defaults>
</compile_context>

<pallas_src>
import functools
import math

import jax
import jax.numpy as jnp
from jax.experimental import pallas as pl
from jax.experimental.pallas import tpu as pltpu


def _to_2tuple(x):
    if isinstance(x, (tuple, list)):
        return tuple(x)
    return (x, x)


def _round_up(x, m):
    return ((x + m - 1) // m) * m


def _choose_tile_m(m, max_tile):
    """Patch-row tile: multiple of 8 sublanes; >=2 grid steps when possible
    (so the 'parallel' axis can shard across v7x's two TensorCores); for large
    M prefer a tile that divides the 8-aligned M exactly (no pad/slice pass)."""
    m8 = _round_up(max(m, 8), 8)
    if m8 <= 2 * max_tile:
        n_tiles = 2 if m8 >= 16 else 1
        return _round_up(-(-m8 // n_tiles), 8)
    # Largest tile in (max_tile/2, max_tile] that divides m8 exactly.
    for t in range(max_tile, max_tile // 2, -8):
        if m8 % t == 0:
            return t
    return max_tile


# ----------------------------- Pallas kernel --------------------------------
def _proj_kernel(p_ref, w_ref, b_ref, o_ref):
    """(TILE_M, K) @ (K, N) + bias, one output tile per grid step.

    p_ref : (TILE_M, K) bf16  patch rows
    w_ref : (K, N)      bf16  projection weight (grid-invariant block)
    b_ref : (1, N)      f32   bias              (grid-invariant block)
    o_ref : (TILE_M, N) bf16  output tile (f32 accumulate, bf16 store)
    """
    acc = jnp.dot(p_ref[...], w_ref[...], preferred_element_type=jnp.float32)
    o_ref[...] = (acc + b_ref[...]).astype(o_ref.dtype)


def _proj_pallas(patches, weight, bias, *, tile_m):
    m_pad, k = patches.shape
    _, n = weight.shape
    grid_m = m_pad // tile_m

    cost = pl.CostEstimate(
        flops=2 * m_pad * k * n,
        transcendentals=0,
        bytes_accessed=(m_pad * k * patches.dtype.itemsize
                        + k * n * weight.dtype.itemsize
                        + n * bias.dtype.itemsize
                        + m_pad * n * 2),
    )

    return pl.pallas_call(
        _proj_kernel,
        out_shape=jax.ShapeDtypeStruct((m_pad, n), jnp.bfloat16),
        grid=(grid_m,),
        in_specs=[
            pl.BlockSpec((tile_m, k), lambda i: (i, 0)),
            pl.BlockSpec((k, n), lambda i: (0, 0)),   # grid-invariant weight
            pl.BlockSpec((1, n), lambda i: (0, 0)),   # grid-invariant bias
        ],
        out_specs=pl.BlockSpec((tile_m, n), lambda i: (i, 0)),
        compiler_params=pltpu.CompilerParams(
            dimension_semantics=("parallel",),
        ),
        cost_estimate=cost,
    )(patches, weight, bias)


# ----------------------------- Fused forward ---------------------------------
@functools.partial(
    jax.jit,
    static_argnames=("patch_size", "stride_size", "embed_dim",
                     "num_y", "num_x", "tile_m"))
def _patch_embed_forward(x, w_mat, b_mat, *, patch_size, stride_size,
                         embed_dim, num_y, num_x, tile_m):
    B, C, H, W = x.shape
    ph, pw = patch_size
    sy, sx = stride_size
    ny, nx = num_y, num_x

    # im2col via static strided slices (pure data movement, no MXU work).
    # Cast to bf16 FIRST so the slab is produced/written at half width.
    x_nhwc = jnp.transpose(x.astype(jnp.bfloat16), (0, 2, 3, 1))  # (B, H, W, C)
    slices = []
    for dy in range(ph):
        for dx in range(pw):
            sl = x_nhwc[:, dy:dy + (ny - 1) * sy + 1:sy,
                           dx:dx + (nx - 1) * sx + 1:sx, :]       # (B, ny, nx, C)
            slices.append(sl)
    # Feature order along K is (dy, dx, c); w_mat rows were permuted to match.
    patches = jnp.concatenate(slices, axis=-1)                    # (B, ny, nx, K)

    M = B * ny * nx
    K = C * ph * pw
    patches = patches.reshape(M, K)                                # free merge

    m_pad = _round_up(M, tile_m)
    if m_pad != M:                                                 # no-op at ViT scale
        patches = jnp.pad(patches, ((0, m_pad - M), (0, 0)))

    out = _proj_pallas(patches, w_mat, b_mat, tile_m=tile_m)       # (m_pad, E) bf16
    if m_pad != M:
        out = out[:M]
    return out.reshape(B, ny * nx, embed_dim)


# ----------------------------- Module wrapper --------------------------------
class PatchEmbedOverlap:
    """JAX/Pallas port of PatchEmbed_overlap (overlapping patch embedding).

    Output is bf16 (f32 MXU accumulate + f32 bias, bf16 store) -- intentional:
    it halves the dominant HBM stream of the projection and embeddings feed a
    bf16 transformer stack downstream.
    """

    # Patch-row tile cap; see header comment (v6e/v5e can go 4096 with
    # vmem_limit_bytes=64<<20, but the step overhead is already <5% at 2048).
    MAX_TILE_M = 2048

    def __init__(self, img_size=16, patch_size=4, stride_size=3, in_chans=4,
                 embed_dim=32, key=None):
        img_size = _to_2tuple(img_size)
        patch_size = _to_2tuple(patch_size)
        stride_size = _to_2tuple(stride_size)
        self.img_size = img_size
        self.patch_size = patch_size
        self.stride_size = stride_size
        self.in_chans = in_chans
        self.embed_dim = embed_dim
        self.num_y = (img_size[0] - patch_size[0]) // stride_size[0] + 1
        self.num_x = (img_size[1] - patch_size[1]) // stride_size[1] + 1
        self.num_patches = self.num_x * self.num_y
        print('using stride: {}, and patch number is num_y{} * num_x{}'.format(
            stride_size, self.num_y, self.num_x))

        self.k = in_chans * patch_size[0] * patch_size[1]

        if key is None:
            key = jax.random.PRNGKey(0)
        k_w, k_b = jax.random.split(key)

        # Conv2d weight (E, C, ph, pw), init ~ N(0, sqrt(2 / (ph*pw*E))).
        n = patch_size[0] * patch_size[1] * embed_dim
        w = jax.random.normal(
            k_w, (embed_dim, in_chans, patch_size[0], patch_size[1]),
            dtype=jnp.float32) * math.sqrt(2.0 / n)
        # Conv2d bias: PyTorch default U(-1/sqrt(fan_in), 1/sqrt(fan_in)).
        bound = 1.0 / math.sqrt(self.k)
        b = jax.random.uniform(k_b, (embed_dim,), dtype=jnp.float32,
                               minval=-bound, maxval=bound)

        # Keep f32 originals for the reference check.
        self.w_conv = w
        self.bias = b

        # Projection weight (K, E) with row order (dy, dx, c) to match the
        # in-script im2col feature order; bf16 for the MXU.  No K/N padding:
        # blocks span the full extents (768 is already lane-dense for ViT).
        w_mat = jnp.transpose(w, (2, 3, 1, 0)).reshape(self.k, embed_dim)
        self.w_mat = w_mat.astype(jnp.bfloat16)
        # Bias kept in f32, added after the f32 accumulate.
        self.b_mat = b.reshape(1, embed_dim)

    def __call__(self, x):
        B, C, H, W = x.shape
        assert H == self.img_size[0] and W == self.img_size[1], (
            f"Input image size ({H}*{W}) doesn't match model "
            f"({self.img_size[0]}*{self.img_size[1]}).")
        M = B * self.num_patches
        tile_m = _choose_tile_m(M, self.MAX_TILE_M)
        return _patch_embed_forward(
            x, self.w_mat, self.b_mat,
            patch_size=self.patch_size, stride_size=self.stride_size,
            embed_dim=self.embed_dim, num_y=self.num_y, num_x=self.num_x,
            tile_m=tile_m)


# ----------------------------- Reference (pure JAX) --------------------------
def _reference(x, module):
    y = jax.lax.conv_general_dilated(
        x, module.w_conv, window_strides=module.stride_size, padding='VALID',
        dimension_numbers=('NCHW', 'OIHW', 'NCHW'),
        precision=jax.lax.Precision.HIGHEST)
    y = y + module.bias.reshape(1, module.embed_dim, 1, 1)
    B = x.shape[0]
    return y.reshape(B, module.embed_dim, -1).transpose(0, 2, 1)


if __name__ == "__main__":
    key = jax.random.PRNGKey(0)
    k_x, k_p = jax.random.split(key)

    # Small shapes consistent with the module: B=2, C=4, H=W=16,
    # patch=4, stride=3 (overlapping) -> num_y=num_x=5, 25 patches, embed_dim=32.
    B, C, H, W = 2, 4, 16, 16
    x = jax.random.normal(k_x, (B, C, H, W), dtype=jnp.float32)

    module = PatchEmbedOverlap(img_size=16, patch_size=4, stride_size=3,
                               in_chans=C, embed_dim=32, key=k_p)

    out = jax.block_until_ready(module(x))
    ref = _reference(x, module)

    assert out.shape == (B, module.num_patches, module.embed_dim), out.shape
    # bf16 inputs/outputs with f32 accumulation -> relaxed tolerance.
    out_f32 = out.astype(jnp.float32)
    err = float(jnp.max(jnp.abs(out_f32 - ref)))
    assert jnp.allclose(out_f32, ref, atol=3e-2, rtol=3e-2), \
        f"mismatch, max err {err}"

    print("KERNEL_OK")
</pallas_src>

<mosaic_0001>
module attributes {stable_mosaic.version = 11 : i64} {
  func.func @_proj_kernel(%arg0: i32, %arg1: memref<32x64xbf16, #tpu.memory_space<vmem>>, %arg2: memref<64x32xbf16, #tpu.memory_space<vmem>>, %arg3: memref<1x32xf32, #tpu.memory_space<vmem>>, %arg4: memref<32x32xbf16, #tpu.memory_space<vmem>>) attributes {dimension_semantics = [#tpu.dimension_semantics<parallel>], iteration_bounds = array<i64: 2>, scalar_prefetch = 0 : i64, scratch_operands = 0 : i64, tpu.core_type = #tpu.core_type<tc>, window_params = [{transform_indices = @transform_0, window_bounds = array<i64: 32, 64>}, {pipeline_mode = #tpu.pipeline_mode<synchronous>, transform_indices = @transform_1, window_bounds = array<i64: 64, 32>}, {pipeline_mode = #tpu.pipeline_mode<synchronous>, transform_indices = @transform_2, window_bounds = array<i64: 1, 32>}, {transform_indices = @transform_3, window_bounds = array<i64: 32, 32>}]} {
    %c0 = arith.constant 0 : index
    %c0_0 = arith.constant 0 : index
    %0 = vector.load %arg1[%c0, %c0_0] : memref<32x64xbf16, #tpu.memory_space<vmem>>, vector<32x64xbf16>
    %c0_1 = arith.constant 0 : index
    %c0_2 = arith.constant 0 : index
    %1 = vector.load %arg2[%c0_1, %c0_2] : memref<64x32xbf16, #tpu.memory_space<vmem>>, vector<64x32xbf16>
    %cst = arith.constant dense<0.000000e+00> : vector<32x32xf32>
    %2 = tpu.matmul %0, %1, %cst {dimension_numbers = #tpu.dot_dimension_numbers<[1], [0], [0], [1], [0, 0, 1, 1], [], []>} : vector<32x64xbf16>, vector<64x32xbf16>, vector<32x32xf32> -> vector<32x32xf32>
    %c0_3 = arith.constant 0 : index
    %c0_4 = arith.constant 0 : index
    %3 = vector.load %arg3[%c0_3, %c0_4] : memref<1x32xf32, #tpu.memory_space<vmem>>, vector<1x32xf32>
    %4 = vector.broadcast %3 : vector<1x32xf32> to vector<32x32xf32>
    %5 = arith.addf %2, %4 : vector<32x32xf32>
    %6 = arith.truncf %5 : vector<32x32xf32> to vector<32x32xbf16>
    %c0_5 = arith.constant 0 : index
    %c0_6 = arith.constant 0 : index
    %7 = vector.load %arg4[%c0_5, %c0_6] : memref<32x32xbf16, #tpu.memory_space<vmem>>, vector<32x32xbf16>
    tpu.vector_store %arg4[%c0_5, %c0_6], %6 {strides = array<i32>} : memref<32x32xbf16, #tpu.memory_space<vmem>>, vector<32x32xbf16>,
    return
  }
  func.func @transform_0(%arg0: i32) -> (i32, i32) {
    %c0_i32 = arith.constant 0 : i32
    %c0_i32_0 = arith.constant 0 : i32
    return %arg0, %c0_i32 : i32, i32
  }
  func.func @transform_1(%arg0: i32) -> (i32, i32) {
    %c0_i32 = arith.constant 0 : i32
    %c0_i32_0 = arith.constant 0 : i32
    %c0_i32_1 = arith.constant 0 : i32
    return %c0_i32, %c0_i32_0 : i32, i32
  }
  func.func @transform_2(%arg0: i32) -> (i32, i32) {
    %c0_i32 = arith.constant 0 : i32
    %c0_i32_0 = arith.constant 0 : i32
    %c0_i32_1 = arith.constant 0 : i32
    return %c0_i32, %c0_i32_0 : i32, i32
  }
  func.func @transform_3(%arg0: i32) -> (i32, i32) {
    %c0_i32 = arith.constant 0 : i32
    %c0_i32_0 = arith.constant 0 : i32
    return %arg0, %c0_i32 : i32, i32
  }
}

</mosaic_0001>

<llo_original>
// kernel: _patch_embed_forward.1
$region0: #{_patch_embed_forward.1}
  #allocation0 [shape = 'u32[]', space=smem, size = 0x4, offset = 0x4, fixed_abs, tag = 'smem constant byte address 0x4 - core index']
  #allocation1 [shape = 'u32[144,128]{1,0:T(1,128)}', space=vmem, size = 0x12000, scoped, tag = 'internal scratch']
  %s0 = inlined_call_operand.vmem [shape: bf16[64,64], index: 0, kind: input, shape index: {}]
  %s1 = inlined_call_operand.vmem [shape: bf16[64,32], index: 1, kind: input, shape index: {}]
  %s2 = inlined_call_operand.vmem [shape: f32[1,32], index: 2, kind: input, shape index: {}]
  %s3 = inlined_call_operand.vmem [shape: bf16[64,32], index: 3, kind: output, shape index: {}]
  %s4 = sld [smem:[#allocation0]]
  $region45: #{_patch_embed_forward.1} parent=0
    _
  %s6 = ssub.s32 1, %s4
  %s7 = scalar_select 0, %s6, %s4
  loop: start=0, step=1, limit=4
  $region2: #{_patch_embed_forward.1} parent=0 // loop_pre_header
    _
  $region3: #{_patch_embed_forward.1} parent=0 // loop_header
    %s9 = sphi 0, %s13
    %p10 = scmp.ge.s32.totalorder %s9, 4
    %s19 = sphi 0, %s21
    %s22 = sphi 0, %s19
    %s23 = sphi 0, %s22
    %s39 = sphi 0, %s23
    %s43 = sphi 0, %s43
    %s45 = sphi 0, %s43
    %s46 = sphi 0, %s45
    %s60 = sphi 0, %s46
    %s64 = sphi 0, %s64
    %s66 = sphi 0, %s64
    %s67 = sphi 0, %s66
    %s81 = sphi 0, %s67
    %s87 = sphi 0, %s89
    %s90 = sphi 0, %s87
    %s91 = sphi 0, %s90
    %s107 = sphi 0, %s91
  $region4: #{_patch_embed_forward.1} parent=0 // loop_header_branch
    %12 = sbr.rel (%p10) target = $region8
  $region5: #{_patch_embed_forward.1} parent=0 // loop_body
    %s14 = ssub.s32 %s9, 1
    %s15 = ssub.s32 %s9, 2
    %s16 = sadd.s32 %s9, 1
    %s17 = ssub.s32 %s9, %s16
    %p18 = scmp.eq.s32.totalorder %s17, 0
    %s20 = sadd.s32 %s19, 1
    %s21 = scalar_select %p18, %s19, %s20
    %p24 = pneg %p18
    %p25 = scmp.eq.s32.totalorder %s9, 1
    %p26 = por %p24, %p25
    %p27 = scmp.ne.s32.totalorder %s19, %s22
    %p28 = scmp.eq.s32.totalorder %s9, 0
    %p29 = por %p27, %p28
    %p30 = scmp.ne.s32.totalorder %s19, %s22
    %p31 = scmp.eq.s32.totalorder %s14, 1
    %p32 = por %p30, %p31
    %p33 = scmp.ne.s32.totalorder %s22, %s23
    %p34 = scmp.eq.s32.totalorder %s14, 0
    %p35 = por %p33, %p34
    %p36 = scmp.ne.s32.totalorder %s22, %s23
    %p37 = scmp.eq.s32.totalorder %s15, 1
    %p38 = por %p36, %p37
    %p40 = scmp.ne.s32.totalorder %s23, %s39
    %p41 = scmp.eq.s32.totalorder %s15, 0
    %p42 = por %p40, %p41
    %s44 = sadd.s32 %s43, 1
    %p47 = scmp.eq.s32.totalorder %s9, 1
    %p48 = scmp.ne.s32.totalorder %s43, %s45
    %p49 = scmp.eq.s32.totalorder %s9, 0
    %p50 = por %p48, %p49
    %p51 = scmp.ne.s32.totalorder %s43, %s45
    %p52 = scmp.eq.s32.totalorder %s14, 1
    %p53 = por %p51, %p52
    %p54 = scmp.ne.s32.totalorder %s45, %s46
    %p55 = scmp.eq.s32.totalorder %s14, 0
    %p56 = por %p54, %p55
    %p57 = scmp.ne.s32.totalorder %s45, %s46
    %p58 = scmp.eq.s32.totalorder %s15, 1
    %p59 = por %p57, %p58
    %p61 = scmp.ne.s32.totalorder %s46, %s60
    %p62 = scmp.eq.s32.totalorder %s15, 0
    %p63 = por %p61, %p62
    %s65 = sadd.s32 %s64, 1
    %p68 = scmp.eq.s32.totalorder %s9, 1
    %p69 = scmp.ne.s32.totalorder %s64, %s66
    %p70 = scmp.eq.s32.totalorder %s9, 0
    %p71 = por %p69, %p70
    %p72 = scmp.ne.s32.totalorder %s64, %s66
    %p73 = scmp.eq.s32.totalorder %s14, 1
    %p74 = por %p72, %p73
    %p75 = scmp.ne.s32.totalorder %s66, %s67
    %p76 = scmp.eq.s32.totalorder %s14, 0
    %p77 = por %p75, %p76
    %p78 = scmp.ne.s32.totalorder %s66, %s67
    %p79 = scmp.eq.s32.totalorder %s15, 1
    %p80 = por %p78, %p79
    %p82 = scmp.ne.s32.totalorder %s67, %s81
    %p83 = scmp.eq.s32.totalorder %s15, 0
    %p84 = por %p82, %p83
    %s85 = ssub.s32 %s9, %s16
    %p86 = scmp.eq.s32.totalorder %s85, 0
    %s88 = sadd.s32 %s87, 1
    %s89 = scalar_select %p86, %s87, %s88
    %p92 = pneg %p86
    %p93 = scmp.eq.s32.totalorder %s9, 1
    %p94 = por %p92, %p93
    %p95 = scmp.ne.s32.totalorder %s87, %s90
    %p96 = scmp.eq.s32.totalorder %s9, 0
    %p97 = por %p95, %p96
    %p98 = scmp.ne.s32.totalorder %s87, %s90
    %p99 = scmp.eq.s32.totalorder %s14, 1
    %p100 = por %p98, %p99
    %p101 = scmp.ne.s32.totalorder %s90, %s91
    %p102 = scmp.eq.s32.totalorder %s14, 0
    %p103 = por %p101, %p102
    %p104 = scmp.ne.s32.totalorder %s90, %s91
    %p105 = scmp.eq.s32.totalorder %s15, 1
    %p106 = por %p104, %p105
    %p108 = scmp.ne.s32.totalorder %s91, %s107
    %p109 = scmp.eq.s32.totalorder %s15, 0
    %p110 = por %p108, %p109
    %p111 = scmp.le.s32.totalorder 1, %s9
    %p112 = scmp.lt.s32.totalorder %s9, 3
    %p113 = pnand %p111, %p112
    %p114 = pneg %p113
    // Predicated region
    $region9: #{_patch_embed_forward.1} parent=5 // pred_check
      _
    $region10: #{_patch_embed_forward.1} parent=5 // pred_check_branch
      %116 = sbr.rel (%p113) target = $region12
    $region11: #{_patch_embed_forward.1} parent=5 // pred_region
      %s117 = ssub.s32 %s9, 1
      // Predicated region
      $region13: #{_patch_embed_forward.1} parent=11 // pred_check
        %p118 = pneg %p56
      $region14: #{_patch_embed_forward.1} parent=11 // pred_check_branch
        %120 = sbr.rel (%p118) target = $region16
      $region15: #{_patch_embed_forward.1} parent=11 // pred_region
        _
      $region16: #{_patch_embed_forward.1} parent=11 // pred_fallthru
        _
      // Predicated region
      $region17: #{_patch_embed_forward.1} parent=11 // pred_check
        %p121 = pneg %p77
      $region18: #{_patch_embed_forward.1} parent=11 // pred_check_branch
        %123 = sbr.rel (%p121) target = $region20
      $region19: #{_patch_embed_forward.1} parent=11 // pred_region
        _
      $region20: #{_patch_embed_forward.1} parent=11 // pred_fallthru
        _
    $region12: #{_patch_embed_forward.1} parent=5 // pred_fallthru
      _
    %p124 = scmp.lt.s32.totalorder %s9, 2
    // Predicated region
    $region21: #{_patch_embed_forward.1} parent=5 // pred_check
      %p125 = pneg %p124
    $region22: #{_patch_embed_forward.1} parent=5 // pred_check_branch
      %127 = sbr.rel (%p125) target = $region24
    $region23: #{_patch_embed_forward.1} parent=5 // pred_region
      // Predicated region
      $region25: #{_patch_embed_forward.1} parent=23 // pred_check
        %p128 = pneg %p29
      $region26: #{_patch_embed_forward.1} parent=23 // pred_check_branch
        %130 = sbr.rel (%p128) target = $region28
      $region27: #{_patch_embed_forward.1} parent=23 // pred_region
        %s131 = smul.u32 4, %s9
        %p132 = scmp.lt.s32.totalorder %s131, 7
        %s133 = scalar_select %p132, %s131, 7
        %s134 = smul.addr %s133, 4
        %s135 = scalar_lea.vmem %s0, %s134
        %s136 = smul.u32 4, %s9
      $region28: #{_patch_embed_forward.1} parent=23 // pred_fallthru
        _
    $region24: #{_patch_embed_forward.1} parent=5 // pred_fallthru
      _
    %p137 = scmp.le.s32.totalorder 1, %s9
    %p138 = scmp.lt.s32.totalorder %s9, 3
    %p139 = pnand %p137, %p138
    %p140 = pneg %p139
    // Predicated region
    $region29: #{_patch_embed_forward.1} parent=5 // pred_check
      _
    $region30: #{_patch_embed_forward.1} parent=5 // pred_check_branch
      %142 = sbr.rel (%p139) target = $region32
    $region31: #{_patch_embed_forward.1} parent=5 // pred_region
      %s143 = ssub.s32 %s9, 1
      %s144 = smul.u32 4, %s14
      %p145 = scmp.lt.s32.totalorder %s144, 7
      %s146 = scalar_select %p145, %s144, 7
      %s147 = smul.addr %s146, 4
      %s148 = scalar_lea.vmem %s0, %s147
      %p149 = pneg %p35
      %p150 = pneg %p32
      %p151 = pneg %p56
      %p152 = pneg %p53
      %p153 = pneg %p77
      %p154 = pneg %p74
      %p155 = pneg %p103
      %p156 = pneg %p100
      %s157 = smul.u32 4, %s14
      %p158 = scmp.lt.s32.totalorder %s157, 7
      %s159 = scalar_select %p158, %s157, 7
      %s160 = smul.addr %s159, 4
      %s161 = scalar_lea.vmem %s3, %s160
      %s162 = smul.u32 4, %s14
      %p163 = scmp.lt.s32.totalorder %s162, 7
      %s164 = scalar_select %p163, %s162, 7
      %s165 = smul.addr %s164, 4
      %s166 = scalar_lea.vmem %s0, %s165
      %s167 = smul.u32 4, %s14
      %s168 = smul.u32 4, %s14
      %p169 = scmp.lt.s32.totalorder %s168, 7
      %s170 = scalar_select %p169, %s168, 7
      %s171 = smul.addr %s170, 4
      %s172 = scalar_lea.vmem %s3, %s171
      %s173 = smul.u32 4, %s14
      %v175 = vld [vmem:[%s166] sm:$0xf]
      %v176 = vld [vmem:[%s166 + $0x4] sm:$0xf]
      %v177 = vld [vmem:[%s166 + $0x8] sm:$0xf]
      %v178 = vld [vmem:[%s166 + $0xc] sm:$0xf]
      %v179 = vld [vmem:[%s1] sm:$0xf]
      %v180 = vld [vmem:[%s1 + $0x4] sm:$0xf]
      %v181 = vld [vmem:[%s1 + $0x8] sm:$0xf]
      %v182 = vld [vmem:[%s1 + $0xc] sm:$0xf]
      %v183 = vld [vmem:[%s1 + $0x10] sm:$0xf]
      %v184 = vld [vmem:[%s1 + $0x14] sm:$0xf]
      %v185 = vld [vmem:[%s1 + $0x18] sm:$0xf]
      %v186 = vld [vmem:[%s1 + $0x1c] sm:$0xf]
      %v187 = vld [vmem:[%s2] sm:$0x1]
      %v189 = vlaneseq
      %v190 = vshrl.u32 %v189, 7
      %v191 = vsub.s32 0, %v190
      %v192 = vrot.slane %v187, %v191
      %v198 = vunpack.c.l.b16 %v175
      %v199 = vunpack.c.l.b16 %v176
      %v200 = vunpack.c.l.b16 %v177
      %v201 = vunpack.c.l.b16 %v178
      %v202 = vpack.c.b16 %v199, %v198
      %v203 = vpack.c.b16 %v201, %v200
      %v212 = vunpack.c.l.b16 %v179
      %v213 = vunpack.c.l.b16 %v180
      %v214 = vunpack.c.l.b16 %v181
      %v215 = vunpack.c.l.b16 %v182
      %v216 = vunpack.c.l.b16 %v183
      %v217 = vunpack.c.l.b16 %v184
      %v218 = vunpack.c.l.b16 %v185
      %v219 = vunpack.c.l.b16 %v186
      %v220 = vpack.c.b16 %v213, %v212
      %v221 = vpack.c.b16 %v215, %v214
      %v222 = vpack.c.b16 %v217, %v216
      %v223 = vpack.c.b16 %v219, %v218
      %vm228 = vcmask 523264
      %v230 = vsel %vm228, %v202, 0
      %v233 = vsel %vm228, %v203, 0
      %235 = vmatprep.subr.bf16.mxu0 0
      %236 = vmatpush1.bf16.msra.mxu0 %v220
      %237 = vmatprep.subr.bf16.mxu0 0
      %238 = vmatpush1.bf16.msra.mxu0 %v221
      %239 = vmatprep.subr.bf16.mxu0 0
      %240 = vmatpush1.bf16.msra.mxu0 %v222
      %241 = vmatprep.subr.bf16.mxu0 0
      %242 = vmatpush1.bf16.msra.mxu0 %v223
      %243 = vmatprep.subr.bf16.mxu0 0
      %244 = vmatpush1.bf16.msra.mxu0 0
      %245 = vmatprep.subr.bf16.mxu0 0
      %246 = vmatpush1.bf16.msra.mxu0 0
      %247 = vmatprep.subr.bf16.mxu0 0
      %248 = vmatpush1.bf16.msra.mxu0 0
      %249 = vmatprep.subr.bf16.mxu0 0
      %250 = vmatpush1.bf16.msra.mxu0 0
      %251 = vmatprep.subr.bf16.mxu0 0
      %252 = vmatpush1.bf16.msra.mxu0 0
      %253 = vmatprep.subr.bf16.mxu0 0
      %254 = vmatpush1.bf16.msra.mxu0 0
      %255 = vmatprep.subr.bf16.mxu0 0
      %256 = vmatpush1.bf16.msra.mxu0 0
      %257 = vmatprep.subr.bf16.mxu0 0
      %258 = vmatpush1.bf16.msra.mxu0 0
      %259 = vmatprep.subr.bf16.mxu0 0
      %260 = vmatpush1.bf16.msra.mxu0 0
      %261 = vmatprep.subr.bf16.mxu0 0
      %262 = vmatpush1.bf16.msra.mxu0 0
      %263 = vmatprep.subr.bf16.mxu0 0
      %264 = vmatpush1.bf16.msra.mxu0 0
      %265 = vmatprep.subr.bf16.mxu0 0
      %266 = vmatpush1.bf16.msra.mxu0 0
      %267 = vmatprep.mubr.bf16.mxu0 0
      %268 = vmatmul.mubr.bf16.gmra.mrb[0].mxu0 %v230
      %v269 = vpop.f32.mrb[0].mxu0
      %v270 = vadd.f32 %v192, %v269
      %v271 = vpop.f32.mrb[0].mxu0
      %v272 = vpop.f32.mrb[0].mxu0
      %v273 = vadd.f32 %v192, %v272
      %v274 = vpop.f32.mrb[0].mxu0
      %275 = vmatprep.mubr.bf16.mxu0 0
      %276 = vmatmul.mubr.bf16.gmra.mrb[0].mxu0 %v233
      %v277 = vpop.f32.mrb[0].mxu0
      %v278 = vadd.f32 %v192, %v277
      %v279 = vpop.f32.mrb[0].mxu0
      %v280 = vpop.f32.mrb[0].mxu0
      %v281 = vadd.f32 %v192, %v280
      %v282 = vpop.f32.mrb[0].mxu0
      %283 = vdwg.mxu0
      %v284 = vpack.c.bf16 %v273, %v270
      %v285 = vpack.c.bf16 %v281, %v278
      %v288 = vunpack.c.l.b16 %v284
      %v289 = vunpack.c.h.b16 %v284
      %v290 = vunpack.c.l.b16 %v285
      %v291 = vunpack.c.h.b16 %v285
      %v292 = vpack.c.b16 %v288, %v288
      %v293 = vpack.c.b16 %v289, %v289
      %v294 = vpack.c.b16 %v290, %v290
      %v295 = vpack.c.b16 %v291, %v291
      %vm300 = vcmask 257024
      %301 = vst.msk [vmem:[%s172] sm:$0xf] %vm300, %v292
      %302 = vst.msk [vmem:[%s172 + $0x4] sm:$0xf] %vm300, %v293
      %303 = vst.msk [vmem:[%s172 + $0x8] sm:$0xf] %vm300, %v294
      %304 = vst.msk [vmem:[%s172 + $0xc] sm:$0xf] %vm300, %v295
      %s305 = smul.u32 4, %s14
      %p306 = scmp.lt.s32.totalorder %s305, 7
      %s307 = scalar_select %p306, %s305, 7
      %s308 = smul.addr %s307, 4
      %s309 = scalar_lea.vmem %s3, %s308
      // Predicated region
      $region33: #{_patch_embed_forward.1} parent=31 // pred_check
        %p310 = pneg %p100
      $region34: #{_patch_embed_forward.1} parent=31 // pred_check_branch
        %312 = sbr.rel (%p310) target = $region36
      $region35: #{_patch_embed_forward.1} parent=31 // pred_region
        %s313 = smul.u32 4, %s14
      $region36: #{_patch_embed_forward.1} parent=31 // pred_fallthru
        _
    $region32: #{_patch_embed_forward.1} parent=5 // pred_fallthru
      _
    %p314 = scmp.le.s32.totalorder 2, %s9
    // Predicated region
    $region37: #{_patch_embed_forward.1} parent=5 // pred_check
      %p315 = pneg %p314
    $region38: #{_patch_embed_forward.1} parent=5 // pred_check_branch
      %317 = sbr.rel (%p315) target = $region40
    $region39: #{_patch_embed_forward.1} parent=5 // pred_region
      %s318 = ssub.s32 %s9, 2
      // Predicated region
      $region41: #{_patch_embed_forward.1} parent=39 // pred_check
        %p319 = pneg %p106
      $region42: #{_patch_embed_forward.1} parent=39 // pred_check_branch
        %321 = sbr.rel (%p319) target = $region44
      $region43: #{_patch_embed_forward.1} parent=39 // pred_region
        %s322 = smul.u32 4, %s15
        %p323 = scmp.lt.s32.totalorder %s322, 7
        %s324 = scalar_select %p323, %s322, 7
        %s325 = smul.addr %s324, 4
        %s326 = scalar_lea.vmem %s3, %s325
      $region44: #{_patch_embed_forward.1} parent=39 // pred_fallthru
        _
    $region40: #{_patch_embed_forward.1} parent=5 // pred_fallthru
      _
  $region6: #{_patch_embed_forward.1} parent=0 // loop_footer
    %s13 = sadd.s32 1, %s9
  $region7: #{_patch_embed_forward.1} parent=0 // loop_footer_branch
    %8 = sbr.rel target = $region3
  $region8: #{_patch_embed_forward.1} parent=0 // loop_exit
    _

</llo_original>
